<compile_context>
chip_gen: v5e
topology: v5e:2x2
jax: 0.10.0
libtpu: 0.0.40
codegen_flags: <defaults>
</compile_context>

<pallas_src>
import jax
import jax.numpy as jnp
from jax.experimental import pallas as pl
from jax.experimental.pallas import tpu as pltpu


def _conv_affine_kernel(w_ref, b_ref, gamma_ref, beta_ref, p_ref, o_ref):
    # w_ref:      (C4, K)       weight-normed, flattened conv weight
    # b_ref:      (C4, 1)       conv bias
    # gamma/beta: (C4, 1)       NormConv2d learned affine
    # p_ref:      (K, tile_p)   im2col patches (lanes = flattened N*H*W)
    # o_ref:      (C4, tile_p)
    acc = jnp.dot(w_ref[...], p_ref[...], preferred_element_type=jnp.float32)
    out = gamma_ref[...] * (acc + b_ref[...]) + beta_ref[...]
    o_ref[...] = out.astype(o_ref.dtype)


def _im2col_3x3(x):
    """(N, C, H, W) -> (C*9, N*H*W) patches for a 3x3, pad=1, stride=1 conv."""
    N, C, H, W = x.shape
    xp = jnp.pad(x, ((0, 0), (0, 0), (1, 1), (1, 1)))
    cols = jnp.stack([xp[:, :, dy:dy + H, dx:dx + W]
                      for dy in range(3) for dx in range(3)], axis=2)  # (N,C,9,H,W)
    return cols.transpose(1, 2, 0, 3, 4).reshape(C * 9, N * H * W)


def upsample_forward(x, params, *, tile_p=1024):
    """Forward of Upsample(in_ch, out_ch, subpixel=True, conv_layer=NormConv2d)."""
    v, g, b, gamma, beta = params
    N, C_in, H, W = x.shape
    C4 = v.shape[0]                       # 4 * out_channels
    assert C4 % 4 == 0
    C_out = C4 // 4
    K = C_in * 9

    # weight_norm (dim=0): per-output-channel  w = g * v / ||v||_(in,kh,kw)
    norm = jnp.sqrt(jnp.sum(jnp.square(v.astype(jnp.float32)),
                            axis=(1, 2, 3), keepdims=True))
    w_eff = (g.reshape(C4, 1, 1, 1) * v.astype(jnp.float32) / norm)
    w_flat = w_eff.reshape(C4, K)

    patches = _im2col_3x3(x.astype(jnp.float32))          # (K, P)
    P = patches.shape[1]

    # Lane tile: multiple of 128, large but never bigger than (padded) P, and
    # small enough that double-buffered blocks stay far below scoped VMEM
    # (incl. the v7x 32 MiB default).
    tile_p = max(128, min(int(tile_p), pl.cdiv(P, 128) * 128))
    tile_p = (tile_p // 128) * 128
    p_pad = pl.cdiv(P, tile_p) * tile_p
    if p_pad != P:
        patches = jnp.pad(patches, ((0, 0), (0, p_pad - P)))

    b2 = b.reshape(C4, 1).astype(jnp.float32)
    g2 = gamma.reshape(C4, 1).astype(jnp.float32)
    be2 = beta.reshape(C4, 1).astype(jnp.float32)

    out_flat = pl.pallas_call(
        _conv_affine_kernel,
        out_shape=jax.ShapeDtypeStruct((C4, p_pad), jnp.float32),
        grid_spec=pltpu.PrefetchScalarGridSpec(
            num_scalar_prefetch=0,
            grid=(p_pad // tile_p,),
            in_specs=[
                pl.BlockSpec((C4, K), lambda i: (0, 0)),       # weight
                pl.BlockSpec((C4, 1), lambda i: (0, 0)),       # bias
                pl.BlockSpec((C4, 1), lambda i: (0, 0)),       # gamma
                pl.BlockSpec((C4, 1), lambda i: (0, 0)),       # beta
                pl.BlockSpec((K, tile_p), lambda i: (0, i)),   # patches
            ],
            out_specs=pl.BlockSpec((C4, tile_p), lambda i: (0, i)),
        ),
        compiler_params=pltpu.CompilerParams(
            dimension_semantics=("parallel",)),
    )(w_flat, b2, g2, be2, patches)

    conv_out = out_flat[:, :P].reshape(C4, N, H, W).transpose(1, 0, 2, 3)
    # DepthToSpace(block_size=2): (N, 4*C_out, H, W) -> (N, C_out, 2H, 2W)
    y = (conv_out.reshape(N, 2, 2, C_out, H, W)
                 .transpose(0, 3, 4, 1, 5, 2)
                 .reshape(N, C_out, 2 * H, 2 * W))
    return y


def init_params(key, in_channels, out_channels):
    """Deterministic params mimicking NormConv2d (weight_norm'd Conv2d 3x3)."""
    C4 = 4 * out_channels
    k = 3
    kv, kg, kb, kgam, kbet = jax.random.split(key, 5)
    fan_in = in_channels * k * k
    bound = 1.0 / (fan_in ** 0.5)
    v = jax.random.uniform(kv, (C4, in_channels, k, k), jnp.float32, -bound, bound)
    # weight_norm init sets g = ||v||; perturb so the g path is actually exercised.
    g = jnp.sqrt(jnp.sum(v ** 2, axis=(1, 2, 3))) * \
        (1.0 + 0.1 * jax.random.normal(kg, (C4,), jnp.float32))
    b = jax.random.uniform(kb, (C4,), jnp.float32, -bound, bound)
    gamma = jnp.ones((C4,), jnp.float32) + 0.05 * jax.random.normal(kgam, (C4,))
    beta = 0.05 * jax.random.normal(kbet, (C4,), jnp.float32)
    return v, g, b, gamma, beta


def _reference(x, params):
    """Pure-JAX reference of the same forward (for correctness check)."""
    v, g, b, gamma, beta = params
    C4 = v.shape[0]
    norm = jnp.sqrt(jnp.sum(jnp.square(v), axis=(1, 2, 3), keepdims=True))
    w_eff = g.reshape(C4, 1, 1, 1) * v / norm
    out = jax.lax.conv_general_dilated(
        x, w_eff, window_strides=(1, 1), padding=((1, 1), (1, 1)),
        dimension_numbers=("NCHW", "OIHW", "NCHW"),
        precision=jax.lax.Precision.HIGHEST)
    out = out + b.reshape(1, C4, 1, 1)
    out = gamma.reshape(1, C4, 1, 1) * out + beta.reshape(1, C4, 1, 1)
    N, _, H, W = out.shape
    C_out = C4 // 4
    return (out.reshape(N, 2, 2, C_out, H, W)
               .transpose(0, 3, 4, 1, 5, 2)
               .reshape(N, C_out, 2 * H, 2 * W))


if __name__ == "__main__":
    # Small shapes consistent with the module: NCHW input.
    N, C_in, C_out, H, W = 2, 4, 4, 16, 16

    key = jax.random.PRNGKey(0)
    kx, kp = jax.random.split(key)
    x = jax.random.normal(kx, (N, C_in, H, W), dtype=jnp.float32)
    params = init_params(kp, C_in, C_out)

    y = upsample_forward(x, params)
    jax.block_until_ready(y)
    assert y.shape == (N, C_out, 2 * H, 2 * W), y.shape

    y_ref = _reference(x, params)
    err = float(jnp.max(jnp.abs(y - y_ref)))
    assert err < 2e-2, f"mismatch vs reference: max abs err {err}"

    print("KERNEL_OK")
</pallas_src>

<mosaic_0001>
module attributes {stable_mosaic.version = 11 : i64} {
  func.func @_conv_affine_kernel(%arg0: i32, %arg1: memref<16x36xf32, #tpu.memory_space<vmem>>, %arg2: memref<16x1xf32, #tpu.memory_space<vmem>>, %arg3: memref<16x1xf32, #tpu.memory_space<vmem>>, %arg4: memref<16x1xf32, #tpu.memory_space<vmem>>, %arg5: memref<36x512xf32, #tpu.memory_space<vmem>>, %arg6: memref<16x512xf32, #tpu.memory_space<vmem>>) attributes {dimension_semantics = [#tpu.dimension_semantics<parallel>], iteration_bounds = array<i64: 1>, scalar_prefetch = 0 : i64, scratch_operands = 0 : i64, tpu.core_type = #tpu.core_type<tc>, window_params = [{pipeline_mode = #tpu.pipeline_mode<synchronous>, transform_indices = @transform_0, window_bounds = array<i64: 16, 36>}, {pipeline_mode = #tpu.pipeline_mode<synchronous>, transform_indices = @transform_1, window_bounds = array<i64: 16, 1>}, {pipeline_mode = #tpu.pipeline_mode<synchronous>, transform_indices = @transform_2, window_bounds = array<i64: 16, 1>}, {pipeline_mode = #tpu.pipeline_mode<synchronous>, transform_indices = @transform_3, window_bounds = array<i64: 16, 1>}, {transform_indices = @transform_4, window_bounds = array<i64: 36, 512>}, {transform_indices = @transform_5, window_bounds = array<i64: 16, 512>}]} {
    %c0 = arith.constant 0 : index
    %c0_0 = arith.constant 0 : index
    %0 = vector.load %arg1[%c0, %c0_0] : memref<16x36xf32, #tpu.memory_space<vmem>>, vector<16x36xf32>
    %c0_1 = arith.constant 0 : index
    %c0_2 = arith.constant 0 : index
    %1 = vector.load %arg5[%c0_1, %c0_2] : memref<36x512xf32, #tpu.memory_space<vmem>>, vector<36x512xf32>
    %cst = arith.constant dense<0.000000e+00> : vector<16x512xf32>
    %2 = tpu.matmul %0, %1, %cst {dimension_numbers = #tpu.dot_dimension_numbers<[1], [0], [0], [1], [0, 0, 1, 1], [], []>} : vector<16x36xf32>, vector<36x512xf32>, vector<16x512xf32> -> vector<16x512xf32>
    %c0_3 = arith.constant 0 : index
    %c0_4 = arith.constant 0 : index
    %3 = vector.load %arg3[%c0_3, %c0_4] : memref<16x1xf32, #tpu.memory_space<vmem>>, vector<16x1xf32>
    %c0_5 = arith.constant 0 : index
    %c0_6 = arith.constant 0 : index
    %4 = vector.load %arg2[%c0_5, %c0_6] : memref<16x1xf32, #tpu.memory_space<vmem>>, vector<16x1xf32>
    %5 = vector.broadcast %4 : vector<16x1xf32> to vector<16x512xf32>
    %6 = arith.addf %2, %5 : vector<16x512xf32>
    %7 = vector.broadcast %3 : vector<16x1xf32> to vector<16x512xf32>
    %8 = arith.mulf %7, %6 : vector<16x512xf32>
    %c0_7 = arith.constant 0 : index
    %c0_8 = arith.constant 0 : index
    %9 = vector.load %arg4[%c0_7, %c0_8] : memref<16x1xf32, #tpu.memory_space<vmem>>, vector<16x1xf32>
    %10 = vector.broadcast %9 : vector<16x1xf32> to vector<16x512xf32>
    %11 = arith.addf %8, %10 : vector<16x512xf32>
    %c0_9 = arith.constant 0 : index
    %c0_10 = arith.constant 0 : index
    %12 = vector.load %arg6[%c0_9, %c0_10] : memref<16x512xf32, #tpu.memory_space<vmem>>, vector<16x512xf32>
    tpu.vector_store %arg6[%c0_9, %c0_10], %11 {strides = array<i32>} : memref<16x512xf32, #tpu.memory_space<vmem>>, vector<16x512xf32>,
    return
  }
  func.func @transform_0(%arg0: i32) -> (i32, i32) {
    %c0_i32 = arith.constant 0 : i32
    %c0_i32_0 = arith.constant 0 : i32
    %c0_i32_1 = arith.constant 0 : i32
    return %c0_i32, %c0_i32_0 : i32, i32
  }
  func.func @transform_1(%arg0: i32) -> (i32, i32) {
    %c0_i32 = arith.constant 0 : i32
    %c0_i32_0 = arith.constant 0 : i32
    %c0_i32_1 = arith.constant 0 : i32
    return %c0_i32, %c0_i32_0 : i32, i32
  }
  func.func @transform_2(%arg0: i32) -> (i32, i32) {
    %c0_i32 = arith.constant 0 : i32
    %c0_i32_0 = arith.constant 0 : i32
    %c0_i32_1 = arith.constant 0 : i32
    return %c0_i32, %c0_i32_0 : i32, i32
  }
  func.func @transform_3(%arg0: i32) -> (i32, i32) {
    %c0_i32 = arith.constant 0 : i32
    %c0_i32_0 = arith.constant 0 : i32
    %c0_i32_1 = arith.constant 0 : i32
    return %c0_i32, %c0_i32_0 : i32, i32
  }
  func.func @transform_4(%arg0: i32) -> (i32, i32) {
    %c0_i32 = arith.constant 0 : i32
    %c0_i32_0 = arith.constant 0 : i32
    return %c0_i32, %arg0 : i32, i32
  }
  func.func @transform_5(%arg0: i32) -> (i32, i32) {
    %c0_i32 = arith.constant 0 : i32
    %c0_i32_0 = arith.constant 0 : i32
    return %c0_i32, %arg0 : i32, i32
  }
}

</mosaic_0001>

<llo_original>
// kernel: tpu_custom_call.1
$region0: #{tpu_custom_call.1}
  #allocation0 [shape = 'u32[]', space=smem, size = 0x4, offset = 0x4, fixed_abs, tag = 'smem constant byte address 0x4 - core index']
  #allocation1 [shape = 'u32[72,128]{1,0:T(1,128)}', space=vmem, size = 0x9000, scoped, tag = 'internal scratch']
  %s0 = inlined_call_operand.vmem [shape: f32[16,36], index: 0, kind: input, shape index: {}]
  %s1 = inlined_call_operand.vmem [shape: f32[16,1], index: 1, kind: input, shape index: {}]
  %s2 = inlined_call_operand.vmem [shape: f32[16,1], index: 2, kind: input, shape index: {}]
  %s3 = inlined_call_operand.vmem [shape: f32[16,1], index: 3, kind: input, shape index: {}]
  %s4 = inlined_call_operand.hbm [shape: f32[36,512], index: 4, kind: input, shape index: {}]
  %s5 = inlined_call_operand.hbm [shape: f32[16,512], index: 5, kind: output, shape index: {}]
  %s6 = sld [smem:[#allocation0]]
  $region34: #{tpu_custom_call.1} parent=0
    _
  %s8 = ssub.s32 1, %s6
  %s9 = scalar_select 0, %s8, %s6
  $region1: #{tpu_custom_call.1} parent=0
    #allocation2 [shape = 'u8[81920]{0}', space=vmem, size = 0x14000, scoped, tag = 'input window, operand 4, single buffered']
    #allocation3 [shape = 's32[1]{0}', space=sflag, size = 0x4, scoped, tag = 'scoped memory for tpu_custom_call.1']
    #allocation4 [shape = 's32[1]{0}', space=sflag, size = 0x4, scoped, tag = 'scoped memory for tpu_custom_call.1']
    #allocation5 [shape = 'u8[32768]{0}', space=vmem, size = 0x8000, scoped, tag = 'output window, operand 0, single buffered']
    %10 = vsyncpa [#allocation3], 0
    %11 = vsyncpa [#allocation4], 0
    // Predicated region
    $region2: #{tpu_custom_call.1} parent=1 // pred_check
      _
    $region3: #{tpu_custom_call.1} parent=1 // pred_check_branch
      %13 = sbr.rel (0) target = $region5
    $region4: #{tpu_custom_call.1} parent=1 // pred_region
      _
    $region5: #{tpu_custom_call.1} parent=1 // pred_fallthru
      _
    // Predicated region
    $region6: #{tpu_custom_call.1} parent=1 // pred_check
      _
    $region7: #{tpu_custom_call.1} parent=1 // pred_check_branch
      %15 = sbr.rel (0) target = $region9
    $region8: #{tpu_custom_call.1} parent=1 // pred_region
      _
    $region9: #{tpu_custom_call.1} parent=1 // pred_fallthru
      _
    // Predicated region
    $region10: #{tpu_custom_call.1} parent=1 // pred_check
      _
    $region11: #{tpu_custom_call.1} parent=1 // pred_check_branch
      %17 = sbr.rel (0) target = $region13
    $region12: #{tpu_custom_call.1} parent=1 // pred_region
      _
    $region13: #{tpu_custom_call.1} parent=1 // pred_fallthru
      _
    // Predicated region
    $region14: #{tpu_custom_call.1} parent=1 // pred_check
      _
    $region15: #{tpu_custom_call.1} parent=1 // pred_check_branch
      %19 = sbr.rel (0) target = $region17
    $region16: #{tpu_custom_call.1} parent=1 // pred_region
      _
    $region17: #{tpu_custom_call.1} parent=1 // pred_fallthru
      _
    // Predicated region
    $region18: #{tpu_custom_call.1} parent=1 // pred_check
      _
    $region19: #{tpu_custom_call.1} parent=1 // pred_check_branch
      %21 = sbr.rel (0) target = $region21
    $region20: #{tpu_custom_call.1} parent=1 // pred_region
      %23 = vsyncadd [#allocation3], 0
      %s24 = sshll.u32 %s4, 4
      %s25 = int_to_ptr.hbm [resolvable:$true] %s24
      %s26 = sshll.u32 [#allocation2], 4
      %s27 = int_to_ptr.vmem [resolvable:$true] %s26
      %32 = dma.hbm_to_vmem [thread:$0]  %s25, 2560, %s27, [#allocation3], 512, 512, 32
    $region21: #{tpu_custom_call.1} parent=1 // pred_fallthru
      _
    // Predicated region
    $region22: #{tpu_custom_call.1} parent=1 // pred_check
      _
    $region23: #{tpu_custom_call.1} parent=1 // pred_check_branch
      %34 = sbr.rel (0) target = $region25
    $region24: #{tpu_custom_call.1} parent=1 // pred_region
      %36 = dma.done [#allocation3], 2560
    $region25: #{tpu_custom_call.1} parent=1 // pred_fallthru
      _
    %v37 = vld [vmem:[%s0] sm:$0xff]
    %v38 = vld [vmem:[%s0 + $0x8] sm:$0xff]
    %v39 = vld [vmem:[#allocation2] sm:$0xff]
    %v40 = vld [vmem:[#allocation2 + $0x8] sm:$0xff]
    %v41 = vld [vmem:[#allocation2 + $0x10] sm:$0xff]
    %v42 = vld [vmem:[#allocation2 + $0x18] sm:$0xff]
    %v43 = vld [vmem:[#allocation2 + $0x20] sm:$0xff]
    %v44 = vld [vmem:[#allocation2 + $0x28] sm:$0xff]
    %v45 = vld [vmem:[#allocation2 + $0x30] sm:$0xff]
    %v46 = vld [vmem:[#allocation2 + $0x38] sm:$0xff]
    %v47 = vld [vmem:[#allocation2 + $0x40] sm:$0xff]
    %v48 = vld [vmem:[#allocation2 + $0x48] sm:$0xff]
    %v49 = vld [vmem:[#allocation2 + $0x50] sm:$0xff]
    %v50 = vld [vmem:[#allocation2 + $0x58] sm:$0xff]
    %v51 = vld [vmem:[#allocation2 + $0x60] sm:$0xff]
    %v52 = vld [vmem:[#allocation2 + $0x68] sm:$0xff]
    %v53 = vld [vmem:[#allocation2 + $0x70] sm:$0xff]
    %v54 = vld [vmem:[#allocation2 + $0x78] sm:$0xff]
    %v55 = vld [vmem:[#allocation2 + $0x80] sm:$0xf]
    %v56 = vld [vmem:[#allocation2 + $0x88] sm:$0xf]
    %v57 = vld [vmem:[#allocation2 + $0x90] sm:$0xf]
    %v58 = vld [vmem:[#allocation2 + $0x98] sm:$0xf]
    %v59 = vld [vmem:[%s2] sm:$0xff]
    %v60 = vld [vmem:[%s2 + $0x8] sm:$0xff]
    %v61 = vld [vmem:[%s1] sm:$0xff]
    %v62 = vld [vmem:[%s1 + $0x8] sm:$0xff]
    %64 = vset.pattern.permute.xlu0 0
    %65 = vperm.xlu0 %64, %v61
    %v66 = vpop.permute.xlu0 %65
    %69 = vset.pattern.permute.xlu0 0
    %70 = vperm.xlu0 %69, %v62
    %v71 = vpop.permute.xlu0 %70
    %vm73 = vcmask 293888
    %v75 = vsel %vm73, %v37, 0
    %v78 = vsel %vm73, %v38, 0
    %vm80 = vcmask 1043456
    %v82 = vsel %vm80, %v55, 0
    %v85 = vsel %vm80, %v56, 0
    %v88 = vsel %vm80, %v57, 0
    %v91 = vsel %vm80, %v58, 0
    %93 = vmatpush.msra.mxu0 0.0
    %94 = vmatpush.msra.mxu0 0.0
    %95 = vmatpush.msra.mxu0 0.0
    %96 = vmatpush.msra.mxu0 0.0
    %97 = vmatpush.msra.mxu0 0.0
    %98 = vmatpush.msra.mxu0 0.0
    %99 = vmatpush.msra.mxu0 0.0
    %100 = vmatpush.msra.mxu0 0.0
    %101 = vmatpush.msra.mxu0 0.0
    %102 = vmatpush.msra.mxu0 0.0
    %103 = vmatpush.msra.mxu0 0.0
    %104 = vmatpush.msra.mxu0 %v82
    %105 = vmatpush.msra.mxu0 %v51
    %106 = vmatpush.msra.mxu0 %v47
    %107 = vmatpush.msra.mxu0 %v43
    %108 = vmatpush.msra.mxu0 %v39
    %109 = vmatmul.f32.gmra.mxu0 %v75
    %v110 = vpop.f32.mrf.mxu0
    %v111 = vadd.f32 %v66, %v110
    %112 = vmatmul.f32.gmra.mxu0 %v78
    %v113 = vpop.f32.mrf.mxu0
    %v114 = vadd.f32 %v71, %v113
    %115 = vdwg.mxu0
    %116 = vmatpush.msra.mxu0 0.0
    %117 = vmatpush.msra.mxu0 0.0
    %118 = vmatpush.msra.mxu0 0.0
    %119 = vmatpush.msra.mxu0 0.0
    %120 = vmatpush.msra.mxu0 0.0
    %121 = vmatpush.msra.mxu0 0.0
    %122 = vmatpush.msra.mxu0 0.0
    %123 = vmatpush.msra.mxu0 0.0
    %124 = vmatpush.msra.mxu0 0.0
    %125 = vmatpush.msra.mxu0 0.0
    %126 = vmatpush.msra.mxu0 0.0
    %127 = vmatpush.msra.mxu0 %v85
    %128 = vmatpush.msra.mxu0 %v52
    %129 = vmatpush.msra.mxu0 %v48
    %130 = vmatpush.msra.mxu0 %v44
    %131 = vmatpush.msra.mxu0 %v40
    %132 = vmatmul.f32.gmra.mxu0 %v75
    %v133 = vpop.f32.mrf.mxu0
    %v134 = vadd.f32 %v66, %v133
    %135 = vmatmul.f32.gmra.mxu0 %v78
    %v136 = vpop.f32.mrf.mxu0
    %v137 = vadd.f32 %v71, %v136
    %138 = vdwg.mxu0
    %139 = vmatpush.msra.mxu0 0.0
    %140 = vmatpush.msra.mxu0 0.0
    %141 = vmatpush.msra.mxu0 0.0
    %142 = vmatpush.msra.mxu0 0.0
    %143 = vmatpush.msra.mxu0 0.0
    %144 = vmatpush.msra.mxu0 0.0
    %145 = vmatpush.msra.mxu0 0.0
    %146 = vmatpush.msra.mxu0 0.0
    %147 = vmatpush.msra.mxu0 0.0
    %148 = vmatpush.msra.mxu0 0.0
    %149 = vmatpush.msra.mxu0 0.0
    %150 = vmatpush.msra.mxu0 %v88
    %151 = vmatpush.msra.mxu0 %v53
    %152 = vmatpush.msra.mxu0 %v49
    %153 = vmatpush.msra.mxu0 %v45
    %154 = vmatpush.msra.mxu0 %v41
    %155 = vmatmul.f32.gmra.mxu0 %v75
    %v156 = vpop.f32.mrf.mxu0
    %v157 = vadd.f32 %v66, %v156
    %158 = vmatmul.f32.gmra.mxu0 %v78
    %v159 = vpop.f32.mrf.mxu0
    %v160 = vadd.f32 %v71, %v159
    %161 = vdwg.mxu0
    %162 = vmatpush.msra.mxu0 0.0
    %163 = vmatpush.msra.mxu0 0.0
    %164 = vmatpush.msra.mxu0 0.0
    %165 = vmatpush.msra.mxu0 0.0
    %166 = vmatpush.msra.mxu0 0.0
    %167 = vmatpush.msra.mxu0 0.0
    %168 = vmatpush.msra.mxu0 0.0
    %169 = vmatpush.msra.mxu0 0.0
    %170 = vmatpush.msra.mxu0 0.0
    %171 = vmatpush.msra.mxu0 0.0
    %172 = vmatpush.msra.mxu0 0.0
    %173 = vmatpush.msra.mxu0 %v91
    %174 = vmatpush.msra.mxu0 %v54
    %175 = vmatpush.msra.mxu0 %v50
    %176 = vmatpush.msra.mxu0 %v46
    %177 = vmatpush.msra.mxu0 %v42
    %178 = vmatmul.f32.gmra.mxu0 %v75
    %v179 = vpop.f32.mrf.mxu0
    %v180 = vadd.f32 %v66, %v179
    %181 = vmatmul.f32.gmra.mxu0 %v78
    %v182 = vpop.f32.mrf.mxu0
    %v183 = vadd.f32 %v71, %v182
    %184 = vdwg.mxu0
    %186 = vset.pattern.permute.xlu0 0
    %187 = vperm.xlu0 %186, %v59
    %v188 = vpop.permute.xlu0 %187
    %191 = vset.pattern.permute.xlu0 0
    %192 = vperm.xlu0 %191, %v60
    %v193 = vpop.permute.xlu0 %192
    %v195 = vmul.f32 %v188, %v111
    %v196 = vmul.f32 %v188, %v134
    %v197 = vmul.f32 %v188, %v157
    %v198 = vmul.f32 %v188, %v180
    %v199 = vmul.f32 %v193, %v114
    %v200 = vmul.f32 %v193, %v137
    %v201 = vmul.f32 %v193, %v160
    %v202 = vmul.f32 %v193, %v183
    %v203 = vld [vmem:[%s3] sm:$0xff]
    %v204 = vld [vmem:[%s3 + $0x8] sm:$0xff]
    %206 = vset.pattern.permute.xlu0 0
    %207 = vperm.xlu0 %206, %v203
    %v208 = vpop.permute.xlu0 %207
    %211 = vset.pattern.permute.xlu0 0
    %212 = vperm.xlu0 %211, %v204
    %v213 = vpop.permute.xlu0 %212
    %v215 = vadd.f32 %v195, %v208
    %v216 = vadd.f32 %v196, %v208
    %v217 = vadd.f32 %v197, %v208
    %v218 = vadd.f32 %v198, %v208
    %v219 = vadd.f32 %v199, %v213
    %v220 = vadd.f32 %v200, %v213
    %v221 = vadd.f32 %v201, %v213
    %v222 = vadd.f32 %v202, %v213
    %223 = vst [vmem:[#allocation5] sm:$0xff] %v215
    %224 = vst [vmem:[#allocation5 + $0x8] sm:$0xff] %v216
    %225 = vst [vmem:[#allocation5 + $0x10] sm:$0xff] %v217
    %226 = vst [vmem:[#allocation5 + $0x18] sm:$0xff] %v218
    %227 = vst [vmem:[#allocation5 + $0x20] sm:$0xff] %v219
    %228 = vst [vmem:[#allocation5 + $0x28] sm:$0xff] %v220
    %229 = vst [vmem:[#allocation5 + $0x30] sm:$0xff] %v221
    %230 = vst [vmem:[#allocation5 + $0x38] sm:$0xff] %v222
    // Predicated region
    $region26: #{tpu_custom_call.1} parent=1 // pred_check
      _
    $region27: #{tpu_custom_call.1} parent=1 // pred_check_branch
      %232 = sbr.rel (0) target = $region29
    $region28: #{tpu_custom_call.1} parent=1 // pred_region
      %234 = vsyncadd [#allocation4], 0
      %s235 = sshll.u32 [#allocation5], 4
      %s236 = int_to_ptr.vmem [resolvable:$true] %s235
      %s237 = sshll.u32 %s5, 4
      %s238 = int_to_ptr.hbm [resolvable:$true] %s237
      %243 = dma.vmem_to_hbm [thread:$0]  %s236, 1024, %s238, [#allocation4], 512, 512, 32
    $region29: #{tpu_custom_call.1} parent=1 // pred_fallthru
      _
    // Predicated region
    $region30: #{tpu_custom_call.1} parent=1 // pred_check
      _
    $region31: #{tpu_custom_call.1} parent=1 // pred_check_branch
      %245 = sbr.rel (0) target = $region33
    $region32: #{tpu_custom_call.1} parent=1 // pred_region
      %247 = dma.done [#allocation4], 1024
    $region33: #{tpu_custom_call.1} parent=1 // pred_fallthru
      _
    %248 = vsyncpa [#allocation3], 1
    %249 = vsyncpa [#allocation4], 1

</llo_original>
